<compile_context>
chip_gen: v5e
topology: v5e:2x2
jax: 0.10.0
libtpu: 0.0.40
codegen_flags: <defaults>
</compile_context>

<pallas_src>
import math

import jax
import jax.numpy as jnp
from jax.experimental import pallas as pl
from jax.experimental.pallas import tpu as pltpu


def _round_up(x, m):
    return (x + m - 1) // m * m


def _pick_tiles(n):
    """Adaptive (row tile, contraction tile, padded rows, padded contraction)."""
    # Row (output) tile: aim for >=2 row tiles (v7x has 2 TensorCores), cap at
    # 512 (mem-bound roofline sweet spot on v5e/v6e), keep sublane-aligned (8).
    if n <= 1024:
        tm = max(8, _round_up((n + 1) // 2, 8))
    else:
        tm = 512
    n_rows = _round_up(n, tm)

    # Contraction tile (adj lane dim / Wh sublane dim).
    if n_rows == n and n % 8 == 0 and n <= 512:
        # Small, already-aligned graph: no padding at all, single k step,
        # adj streamed straight from the caller's f32 array (cast in-kernel).
        tk = n
    else:
        tk = min(1024, _round_up(n, 128))
    n_contr = _round_up(n, tk)
    return tm, tk, n_rows, n_contr


def _wh_kernel(h_ref, w_ref, wh_ref):
    # Wh = h @ W (small matmul), f32 accumulate on the MXU, stored as bf16 so
    # the second (bandwidth-bound) kernel streams half the bytes.
    wh = jnp.dot(h_ref[...], w_ref[...], preferred_element_type=jnp.float32)
    wh_ref[...] = wh.astype(wh_ref.dtype)


def _make_adj_wh_relu_kernel(tk, num_k, wh_resident):
    """relu(adj @ Wh) tile kernel; o_ref (f32, resident over k) is the accumulator."""
    if num_k == 1:
        def kernel(adj_ref, wh_ref, o_ref):
            a = adj_ref[...].astype(jnp.bfloat16)  # no-op if already bf16
            o_ref[...] = jnp.maximum(
                jnp.dot(a, wh_ref[...], preferred_element_type=jnp.float32), 0.0
            )
        return kernel

    def kernel(adj_ref, wh_ref, o_ref):
        k = pl.program_id(1)

        @pl.when(k == 0)
        def _():
            o_ref[...] = jnp.zeros_like(o_ref)

        a = adj_ref[...].astype(jnp.bfloat16)  # no-op if already bf16
        if wh_resident:
            start = pl.multiple_of(k * tk, tk)
            wh = wh_ref[pl.ds(start, tk), :]
        else:
            wh = wh_ref[...]
        o_ref[...] += jnp.dot(a, wh, preferred_element_type=jnp.float32)

        @pl.when(k == num_k - 1)
        def _():
            o_ref[...] = jnp.maximum(o_ref[...], 0.0)

    return kernel


def graph_convolution_layer(h, adj, W):
    """relu(adj @ (h @ W)) via tiled Pallas TPU kernels.

    h:   [N, F_in]      float32
    adj: [N, N]         float32
    W:   [F_in, F_out]  float32
    returns [N, F_out]  float32
    """
    N, f_in = h.shape
    f_out = W.shape[1]
    assert adj.shape == (N, N)
    assert W.shape[0] == f_in

    f_in_p = _round_up(f_in, 128)
    f_out_p = _round_up(f_out, 128)
    tm, tk, n_rows, n_contr = _pick_tiles(N)
    num_k = n_contr // tk
    bf16 = jnp.bfloat16

    # ---- Kernel 1: Wh = h @ W (small, row-tiled, W resident) --------------
    # TODO(synk): for very small F_in/F_out a plain jnp.dot would avoid the
    # bf16 Wh HBM round trip entirely; kept as a Pallas kernel on purpose.
    h_p = jnp.pad(h, ((0, n_contr - N), (0, f_in_p - f_in))).astype(bf16)
    w_p = jnp.pad(W, ((0, f_in_p - f_in), (0, f_out_p - f_out))).astype(bf16)

    if n_contr <= 512:
        tm1 = n_contr            # single row tile
    elif n_contr % 256 == 0:
        tm1 = 256
    else:
        tm1 = 128                # n_contr is always a multiple of 128 here

    wh_p = pl.pallas_call(
        _wh_kernel,
        out_shape=jax.ShapeDtypeStruct((n_contr, f_out_p), bf16),
        grid_spec=pltpu.PrefetchScalarGridSpec(
            num_scalar_prefetch=0,
            grid=(n_contr // tm1,),
            in_specs=[
                pl.BlockSpec((tm1, f_in_p), lambda i: (i, 0)),
                pl.BlockSpec((f_in_p, f_out_p), lambda i: (0, 0)),
            ],
            out_specs=pl.BlockSpec((tm1, f_out_p), lambda i: (i, 0)),
        ),
        compiler_params=pltpu.CompilerParams(
            dimension_semantics=("parallel",)
        ),
        cost_estimate=pl.CostEstimate(
            flops=2 * n_contr * f_in_p * f_out_p,
            transcendentals=0,
            bytes_accessed=(n_contr * f_in_p + f_in_p * f_out_p
                            + n_contr * f_out_p) * 2,
        ),
    )(h_p, w_p)

    # ---- Kernel 2: relu(adj @ Wh), adj-stream is the HBM bottleneck --------
    adj_needs_pad = (n_rows != N) or (n_contr != N)
    if adj_needs_pad:
        # Pad + cast in one XLA pass; kernel then streams 2 B/elem bf16.
        adj_in = jnp.pad(adj, ((0, n_rows - N), (0, n_contr - N))).astype(bf16)
    else:
        # No wrapper copy at all: stream caller's f32 adj, cast in-kernel.
        adj_in = adj
    adj_elt = adj_in.dtype.itemsize

    # Keep Wh fully VMEM-resident (DMA'd once) if it fits the budget alongside
    # the double-buffered adj and output tiles.
    vmem_limit = 32 * 1024 * 1024
    fixed_bytes = 2 * tm * tk * adj_elt + 2 * tm * f_out_p * 4
    wh_bytes = n_contr * f_out_p * 2
    wh_resident = (num_k == 1) or (fixed_bytes + 2 * wh_bytes
                                   <= int(vmem_limit * 0.75))

    kernel2 = _make_adj_wh_relu_kernel(tk, num_k, wh_resident)

    if num_k == 1:
        grid = (n_rows // tm,)
        in_specs = [
            pl.BlockSpec((tm, n_contr), lambda i: (i, 0)),
            pl.BlockSpec((n_contr, f_out_p), lambda i: (0, 0)),
        ]
        out_specs = pl.BlockSpec((tm, f_out_p), lambda i: (i, 0))
        dim_sem = ("parallel",)
    else:
        grid = (n_rows // tm, num_k)   # reduction axis last
        if wh_resident:
            wh_spec = pl.BlockSpec((n_contr, f_out_p), lambda i, k: (0, 0))
        else:
            wh_spec = pl.BlockSpec((tk, f_out_p), lambda i, k: (k, 0))
        in_specs = [
            pl.BlockSpec((tm, tk), lambda i, k: (i, k)),
            wh_spec,
        ]
        out_specs = pl.BlockSpec((tm, f_out_p), lambda i, k: (i, 0))
        dim_sem = ("parallel", "arbitrary")

    wh_reads = 1 if wh_resident else (n_rows // tm)
    out_p = pl.pallas_call(
        kernel2,
        out_shape=jax.ShapeDtypeStruct((n_rows, f_out_p), jnp.float32),
        grid_spec=pltpu.PrefetchScalarGridSpec(
            num_scalar_prefetch=0,
            grid=grid,
            in_specs=in_specs,
            out_specs=out_specs,
        ),
        compiler_params=pltpu.CompilerParams(
            dimension_semantics=dim_sem,
            vmem_limit_bytes=vmem_limit,
        ),
        cost_estimate=pl.CostEstimate(
            flops=2 * n_rows * n_contr * f_out_p,
            transcendentals=0,
            bytes_accessed=(n_rows * n_contr * adj_elt
                            + wh_reads * n_contr * f_out_p * 2
                            + n_rows * f_out_p * 4),
        ),
    )(adj_in, wh_p)

    # Slice away the padding.
    return out_p[:N, :f_out]


def xavier_uniform(key, fan_in, fan_out, gain):
    # Matches torch.nn.init.xavier_uniform_(W, gain): U(-a, a),
    # a = gain * sqrt(6 / (fan_in + fan_out)).
    a = gain * math.sqrt(6.0 / (fan_in + fan_out))
    return jax.random.uniform(
        key, (fan_in, fan_out), dtype=jnp.float32, minval=-a, maxval=a
    )


if __name__ == "__main__":
    # Small, module-consistent shapes: N nodes, in_features -> out_features.
    N = 64
    in_features = 32
    out_features = 32

    key = jax.random.PRNGKey(0)
    k_w, k_h, k_adj = jax.random.split(key, 3)

    # Deterministic parameter init (xavier_uniform with gain=1.414, as in __init__).
    W = xavier_uniform(k_w, in_features, out_features, gain=1.414)

    # Example inputs: node features and a (dense) adjacency matrix.
    h = jax.random.normal(k_h, (N, in_features), dtype=jnp.float32)
    adj = jax.random.uniform(k_adj, (N, N), dtype=jnp.float32)

    out = graph_convolution_layer(h, adj, W)
    out = jax.block_until_ready(out)
    assert out.shape == (N, out_features)

    # Reference that mimics the kernel's bf16 quantization (bf16 operands,
    # f32 accumulate, Wh rounded to bf16 between the two matmuls).
    h_b = h.astype(jnp.bfloat16).astype(jnp.float32)
    w_b = W.astype(jnp.bfloat16).astype(jnp.float32)
    adj_b = adj.astype(jnp.bfloat16).astype(jnp.float32)
    wh_b = (h_b @ w_b).astype(jnp.bfloat16).astype(jnp.float32)
    ref = jnp.maximum(adj_b @ wh_b, 0.0)
    assert jnp.allclose(out, ref, atol=1e-2, rtol=1e-2)

    # Sanity check against pure-f32 math (loose: bf16 input rounding).
    ref_f32 = jnp.maximum(adj @ (h @ W), 0.0)
    assert jnp.allclose(out, ref_f32, atol=2.5e-1, rtol=5e-2)

    print("KERNEL_OK")
</pallas_src>

<mosaic_0001>
module attributes {stable_mosaic.version = 11 : i64} {
  func.func @_wh_kernel(%arg0: i32, %arg1: memref<64x128xbf16, #tpu.memory_space<vmem>>, %arg2: memref<128x128xbf16, #tpu.memory_space<vmem>>, %arg3: memref<64x128xbf16, #tpu.memory_space<vmem>>) attributes {dimension_semantics = [#tpu.dimension_semantics<parallel>], iteration_bounds = array<i64: 1>, scalar_prefetch = 0 : i64, scratch_operands = 0 : i64, tpu.core_type = #tpu.core_type<tc>, window_params = [{transform_indices = @transform_0, window_bounds = array<i64: 64, 128>}, {pipeline_mode = #tpu.pipeline_mode<synchronous>, transform_indices = @transform_1, window_bounds = array<i64: 128, 128>}, {transform_indices = @transform_2, window_bounds = array<i64: 64, 128>}]} {
    %c0 = arith.constant 0 : index
    %c0_0 = arith.constant 0 : index
    %0 = vector.load %arg1[%c0, %c0_0] : memref<64x128xbf16, #tpu.memory_space<vmem>>, vector<64x128xbf16>
    %c0_1 = arith.constant 0 : index
    %c0_2 = arith.constant 0 : index
    %1 = vector.load %arg2[%c0_1, %c0_2] : memref<128x128xbf16, #tpu.memory_space<vmem>>, vector<128x128xbf16>
    %cst = arith.constant dense<0.000000e+00> : vector<64x128xf32>
    %2 = tpu.matmul %0, %1, %cst {dimension_numbers = #tpu.dot_dimension_numbers<[1], [0], [0], [1], [0, 0, 1, 1], [], []>} : vector<64x128xbf16>, vector<128x128xbf16>, vector<64x128xf32> -> vector<64x128xf32>
    %3 = arith.truncf %2 : vector<64x128xf32> to vector<64x128xbf16>
    %c0_3 = arith.constant 0 : index
    %c0_4 = arith.constant 0 : index
    %4 = vector.load %arg3[%c0_3, %c0_4] : memref<64x128xbf16, #tpu.memory_space<vmem>>, vector<64x128xbf16>
    tpu.vector_store %arg3[%c0_3, %c0_4], %3 {strides = array<i32>} : memref<64x128xbf16, #tpu.memory_space<vmem>>, vector<64x128xbf16>,
    return
  }
  func.func @transform_0(%arg0: i32) -> (i32, i32) {
    %c0_i32 = arith.constant 0 : i32
    %c0_i32_0 = arith.constant 0 : i32
    return %arg0, %c0_i32 : i32, i32
  }
  func.func @transform_1(%arg0: i32) -> (i32, i32) {
    %c0_i32 = arith.constant 0 : i32
    %c0_i32_0 = arith.constant 0 : i32
    %c0_i32_1 = arith.constant 0 : i32
    return %c0_i32, %c0_i32_0 : i32, i32
  }
  func.func @transform_2(%arg0: i32) -> (i32, i32) {
    %c0_i32 = arith.constant 0 : i32
    %c0_i32_0 = arith.constant 0 : i32
    return %arg0, %c0_i32 : i32, i32
  }
}

</mosaic_0001>

<llo_original>
// kernel: tpu_custom_call.1
$region0: #{tpu_custom_call.1}
  #allocation0 [shape = 'u32[]', space=smem, size = 0x4, offset = 0x4, fixed_abs, tag = 'smem constant byte address 0x4 - core index']
  #allocation1 [shape = 'u32[72,128]{1,0:T(1,128)}', space=vmem, size = 0x9000, scoped, tag = 'internal scratch']
  %s0 = inlined_call_operand.hbm [shape: bf16[64,128], index: 0, kind: input, shape index: {}]
  %s1 = inlined_call_operand.hbm [shape: bf16[128,128], index: 1, kind: input, shape index: {}]
  %s2 = inlined_call_operand.hbm [shape: bf16[64,128], index: 2, kind: output, shape index: {}]
  %s3 = sld [smem:[#allocation0]]
  $region26: #{tpu_custom_call.1} parent=0
    _
  %s5 = ssub.s32 1, %s3
  %s6 = scalar_select 0, %s5, %s3
  $region1: #{tpu_custom_call.1} parent=0
    #allocation2 [shape = 'u8[16384]{0}', space=vmem, size = 0x4000, scoped, tag = 'input window, operand 0, single buffered']
    #allocation3 [shape = 's32[1]{0}', space=sflag, size = 0x4, scoped, tag = 'scoped memory for tpu_custom_call.1']
    #allocation4 [shape = 's32[1]{0}', space=sflag, size = 0x4, scoped, tag = 'scoped memory for tpu_custom_call.1']
    #allocation5 [shape = 'u8[32768]{0}', space=vmem, size = 0x8000, scoped, tag = 'input window, operand 1, single buffered']
    #allocation6 [shape = 's32[1]{0}', space=sflag, size = 0x4, scoped, tag = 'scoped memory for tpu_custom_call.1']
    #allocation7 [shape = 'u8[16384]{0}', space=vmem, size = 0x4000, scoped, tag = 'output window, operand 0, single buffered']
    %7 = vsyncpa [#allocation3], 0
    %8 = vsyncpa [#allocation6], 0
    %9 = vsyncpa [#allocation4], 0
    // Predicated region
    $region2: #{tpu_custom_call.1} parent=1 // pred_check
      _
    $region3: #{tpu_custom_call.1} parent=1 // pred_check_branch
      %11 = sbr.rel (0) target = $region5
    $region4: #{tpu_custom_call.1} parent=1 // pred_region
      %13 = vsyncadd [#allocation3], 0
      %s14 = sshll.u32 %s0, 4
      %s15 = int_to_ptr.hbm [resolvable:$true] %s14
      %s16 = sshll.u32 [#allocation2], 4
      %s17 = int_to_ptr.vmem [resolvable:$true] %s16
      %22 = dma.hbm_to_vmem [thread:$0]  %s15, 512, %s17, [#allocation3], 64, 64, 4
    $region5: #{tpu_custom_call.1} parent=1 // pred_fallthru
      _
    // Predicated region
    $region6: #{tpu_custom_call.1} parent=1 // pred_check
      _
    $region7: #{tpu_custom_call.1} parent=1 // pred_check_branch
      %24 = sbr.rel (0) target = $region9
    $region8: #{tpu_custom_call.1} parent=1 // pred_region
      %26 = vsyncadd [#allocation6], 0
      %s27 = sshll.u32 %s1, 4
      %s28 = int_to_ptr.hbm [resolvable:$true] %s27
      %s29 = sshll.u32 [#allocation5], 4
      %s30 = int_to_ptr.vmem [resolvable:$true] %s29
      %35 = dma.hbm_to_vmem [thread:$0]  %s28, 1024, %s30, [#allocation6], 64, 64, 4
    $region9: #{tpu_custom_call.1} parent=1 // pred_fallthru
      _
    // Predicated region
    $region10: #{tpu_custom_call.1} parent=1 // pred_check
      _
    $region11: #{tpu_custom_call.1} parent=1 // pred_check_branch
      %37 = sbr.rel (0) target = $region13
    $region12: #{tpu_custom_call.1} parent=1 // pred_region
      %39 = dma.done [#allocation3], 512
    $region13: #{tpu_custom_call.1} parent=1 // pred_fallthru
      _
    // Predicated region
    $region14: #{tpu_custom_call.1} parent=1 // pred_check
      _
    $region15: #{tpu_custom_call.1} parent=1 // pred_check_branch
      %41 = sbr.rel (0) target = $region17
    $region16: #{tpu_custom_call.1} parent=1 // pred_region
      %43 = dma.done [#allocation6], 1024
    $region17: #{tpu_custom_call.1} parent=1 // pred_fallthru
      _
    %v44 = vld [vmem:[#allocation2] sm:$0xf]
    %v45 = vld [vmem:[#allocation2 + $0x4] sm:$0xf]
    %v46 = vld [vmem:[#allocation2 + $0x8] sm:$0xf]
    %v47 = vld [vmem:[#allocation2 + $0xc] sm:$0xf]
    %v48 = vld [vmem:[#allocation2 + $0x10] sm:$0xf]
    %v49 = vld [vmem:[#allocation2 + $0x14] sm:$0xf]
    %v50 = vld [vmem:[#allocation2 + $0x18] sm:$0xf]
    %v51 = vld [vmem:[#allocation2 + $0x1c] sm:$0xf]
    %v52 = vld [vmem:[#allocation5] sm:$0xf]
    %v53 = vld [vmem:[#allocation5 + $0x4] sm:$0xf]
    %v54 = vld [vmem:[#allocation5 + $0x8] sm:$0xf]
    %v55 = vld [vmem:[#allocation5 + $0xc] sm:$0xf]
    %v56 = vld [vmem:[#allocation5 + $0x10] sm:$0xf]
    %v57 = vld [vmem:[#allocation5 + $0x14] sm:$0xf]
    %v58 = vld [vmem:[#allocation5 + $0x18] sm:$0xf]
    %v59 = vld [vmem:[#allocation5 + $0x1c] sm:$0xf]
    %v60 = vld [vmem:[#allocation5 + $0x20] sm:$0xf]
    %v61 = vld [vmem:[#allocation5 + $0x24] sm:$0xf]
    %v62 = vld [vmem:[#allocation5 + $0x28] sm:$0xf]
    %v63 = vld [vmem:[#allocation5 + $0x2c] sm:$0xf]
    %v64 = vld [vmem:[#allocation5 + $0x30] sm:$0xf]
    %v65 = vld [vmem:[#allocation5 + $0x34] sm:$0xf]
    %v66 = vld [vmem:[#allocation5 + $0x38] sm:$0xf]
    %v67 = vld [vmem:[#allocation5 + $0x3c] sm:$0xf]
    %v76 = vunpack.c.l.b16 %v44
    %v77 = vunpack.c.l.b16 %v45
    %v78 = vunpack.c.l.b16 %v46
    %v79 = vunpack.c.l.b16 %v47
    %v80 = vunpack.c.l.b16 %v48
    %v81 = vunpack.c.l.b16 %v49
    %v82 = vunpack.c.l.b16 %v50
    %v83 = vunpack.c.l.b16 %v51
    %v84 = vpack.c.b16 %v77, %v76
    %v85 = vpack.c.b16 %v79, %v78
    %v86 = vpack.c.b16 %v81, %v80
    %v87 = vpack.c.b16 %v83, %v82
    %v108 = vunpack.c.l.b16 %v52
    %v109 = vunpack.c.l.b16 %v53
    %v110 = vunpack.c.l.b16 %v54
    %v111 = vunpack.c.l.b16 %v55
    %v112 = vunpack.c.l.b16 %v56
    %v113 = vunpack.c.l.b16 %v57
    %v114 = vunpack.c.l.b16 %v58
    %v115 = vunpack.c.l.b16 %v59
    %v116 = vunpack.c.l.b16 %v60
    %v117 = vunpack.c.l.b16 %v61
    %v118 = vunpack.c.l.b16 %v62
    %v119 = vunpack.c.l.b16 %v63
    %v120 = vunpack.c.l.b16 %v64
    %v121 = vunpack.c.l.b16 %v65
    %v122 = vunpack.c.l.b16 %v66
    %v123 = vunpack.c.l.b16 %v67
    %v124 = vpack.c.b16 %v109, %v108
    %v125 = vpack.c.b16 %v111, %v110
    %v126 = vpack.c.b16 %v113, %v112
    %v127 = vpack.c.b16 %v115, %v114
    %v128 = vpack.c.b16 %v117, %v116
    %v129 = vpack.c.b16 %v119, %v118
    %v130 = vpack.c.b16 %v121, %v120
    %v131 = vpack.c.b16 %v123, %v122
    %140 = vmatpush.bf16.msra.mxu0 %v131
    %141 = vmatpush.bf16.msra.mxu0 %v130
    %142 = vmatpush.bf16.msra.mxu0 %v129
    %143 = vmatpush.bf16.msra.mxu0 %v128
    %144 = vmatpush.bf16.msra.mxu0 %v127
    %145 = vmatpush.bf16.msra.mxu0 %v126
    %146 = vmatpush.bf16.msra.mxu0 %v125
    %147 = vmatpush.bf16.msra.mxu0 %v124
    %148 = vmatmul.bf16.gmra.mxu0 %v84
    %v149 = vpop.f32.mrf.mxu0
    %v150 = vadd.f32 0.0, %v149
    %v151 = vpop.f32.mrf.mxu0
    %v152 = vadd.f32 0.0, %v151
    %153 = vmatmul.bf16.gmra.mxu0 %v85
    %v154 = vpop.f32.mrf.mxu0
    %v155 = vadd.f32 0.0, %v154
    %v156 = vpop.f32.mrf.mxu0
    %v157 = vadd.f32 0.0, %v156
    %158 = vmatmul.bf16.gmra.mxu0 %v86
    %v159 = vpop.f32.mrf.mxu0
    %v160 = vadd.f32 0.0, %v159
    %v161 = vpop.f32.mrf.mxu0
    %v162 = vadd.f32 0.0, %v161
    %163 = vmatmul.bf16.gmra.mxu0 %v87
    %v164 = vpop.f32.mrf.mxu0
    %v165 = vadd.f32 0.0, %v164
    %v166 = vpop.f32.mrf.mxu0
    %v167 = vadd.f32 0.0, %v166
    %168 = vdwg.mxu0
    %v169 = vpack.c.bf16 %v150, %v150
    %v170 = vpack.c.bf16 %v152, %v152
    %v171 = vpack.c.bf16 %v155, %v155
    %v172 = vpack.c.bf16 %v157, %v157
    %v173 = vpack.c.bf16 %v160, %v160
    %v174 = vpack.c.bf16 %v162, %v162
    %v175 = vpack.c.bf16 %v165, %v165
    %v176 = vpack.c.bf16 %v167, %v167
    %177 = vst [vmem:[#allocation7] sm:$0xf] %v169
    %178 = vst [vmem:[#allocation7 + $0x4] sm:$0xf] %v170
    %179 = vst [vmem:[#allocation7 + $0x8] sm:$0xf] %v171
    %180 = vst [vmem:[#allocation7 + $0xc] sm:$0xf] %v172
    %181 = vst [vmem:[#allocation7 + $0x10] sm:$0xf] %v173
    %182 = vst [vmem:[#allocation7 + $0x14] sm:$0xf] %v174
    %183 = vst [vmem:[#allocation7 + $0x18] sm:$0xf] %v175
    %184 = vst [vmem:[#allocation7 + $0x1c] sm:$0xf] %v176
    // Predicated region
    $region18: #{tpu_custom_call.1} parent=1 // pred_check
      _
    $region19: #{tpu_custom_call.1} parent=1 // pred_check_branch
      %186 = sbr.rel (0) target = $region21
    $region20: #{tpu_custom_call.1} parent=1 // pred_region
      %188 = vsyncadd [#allocation4], 0
      %s189 = sshll.u32 [#allocation7], 4
      %s190 = int_to_ptr.vmem [resolvable:$true] %s189
      %s191 = sshll.u32 %s2, 4
      %s192 = int_to_ptr.hbm [resolvable:$true] %s191
      %197 = dma.vmem_to_hbm [thread:$0]  %s190, 512, %s192, [#allocation4], 64, 64, 4
    $region21: #{tpu_custom_call.1} parent=1 // pred_fallthru
      _
    // Predicated region
    $region22: #{tpu_custom_call.1} parent=1 // pred_check
      _
    $region23: #{tpu_custom_call.1} parent=1 // pred_check_branch
      %199 = sbr.rel (0) target = $region25
    $region24: #{tpu_custom_call.1} parent=1 // pred_region
      %201 = dma.done [#allocation4], 512
    $region25: #{tpu_custom_call.1} parent=1 // pred_fallthru
      _
    %202 = vsyncpa [#allocation3], 1
    %203 = vsyncpa [#allocation6], 1
    %204 = vsyncpa [#allocation4], 1

</llo_original>
